<compile_context>
chip_gen: v5e
topology: v5e:2x2
jax: 0.10.0
libtpu: 0.0.40
codegen_flags: <defaults>
</compile_context>

<pallas_src>
import functools

import jax
import jax.numpy as jnp
from jax import lax
from jax.experimental import pallas as pl
from jax.experimental.pallas import tpu as pltpu


_LANE = 128
_MIB = 1024 * 1024
# Per-step working-set budget (input + output blocks, each double buffered).
# Conservative so the same block choice fits every generation, in particular
# v7x (64 MiB physical VMEM, 32 MiB default scoped limit); v5e/v6e have 128 MiB.
_VMEM_BLOCK_BUDGET = 24 * _MIB
# Target per-step *input* DMA volume (in + out ~4 MiB/step is near the HBM
# streaming roofline; sub-512 KiB tiles are per-step-overhead dominated).
_TARGET_BLOCK_BYTES = 2 * _MIB
_VMEM_LIMIT_FLOOR = 32 * _MIB
_VMEM_LIMIT_CAP = 48 * _MIB          # stay clear of v7x's 64 MiB physical VMEM


def _vmem_limit_bytes(working_set_bytes):
    return int(min(_VMEM_LIMIT_CAP,
                   max(_VMEM_LIMIT_FLOOR, working_set_bytes + 2 * _MIB)))


def _pick_nb(n, bytes_per_sample):
    """Samples per grid step for the fused kernel."""
    nb_vmem = max(1, _VMEM_BLOCK_BUDGET // (4 * bytes_per_sample))
    nb_dma = max(1, _TARGET_BLOCK_BYTES // bytes_per_sample)
    nb = int(min(n, nb_vmem, nb_dma))
    # Keep at least 2 grid steps when the batch allows so both v7x TensorCores
    # get work under dimension_semantics=("parallel",).
    if n >= 2:
        nb = max(1, min(nb, n // 2))
    # Use a divisor of n so there is no ragged trailing block.
    while n % nb:
        nb -= 1
    return nb


def _pick_hw_tile(hw, c, itemsize):
    """Spatial (lane) tile for the rescale-only kernel: multiple of 128 or full."""
    target = (_TARGET_BLOCK_BYTES // max(1, c * itemsize)) // _LANE * _LANE
    target = max(_LANE, target)
    return hw if hw <= target else target


# ----------------------------- kernels ------------------------------------- #

def _se_gate_2d(pooled, w1, w2):
    """pooled: (C, 1) f32 -> sigmoid gate (C, 1) f32 (two bias-free 1x1 convs)."""
    hidden = jnp.maximum(
        jnp.dot(w1, pooled, preferred_element_type=jnp.float32), 0.0)   # (C//r, 1)
    logits = jnp.dot(w2, hidden, preferred_element_type=jnp.float32)    # (C, 1)
    return 1.0 / (1.0 + jnp.exp(-logits))


def _se_fused_real_kernel(x_ref, w1_ref, w2_ref, o_ref, *, inv_hw, nb):
    # x_ref/o_ref: (nb, C, HW); w1_ref: (C//r, C); w2_ref: (C, C//r)
    w1 = w1_ref[...]
    w2 = w2_ref[...]

    @pl.loop(0, nb)
    def _(i):
        xi = x_ref[i].astype(jnp.float32)                               # (C, HW)
        pooled = jnp.sum(jnp.abs(xi), axis=-1, keepdims=True) * inv_hw  # (C, 1)
        scale = _se_gate_2d(pooled, w1, w2)                             # (C, 1)
        o_ref[i] = (xi * scale).astype(o_ref.dtype)


def _se_fused_complex_kernel(xr_ref, xi_ref, w1_ref, w2_ref,
                             or_ref, oi_ref, *, inv_hw, nb):
    w1 = w1_ref[...]
    w2 = w2_ref[...]

    @pl.loop(0, nb)
    def _(i):
        re = xr_ref[i].astype(jnp.float32)                              # (C, HW)
        im = xi_ref[i].astype(jnp.float32)
        mag = jnp.sqrt(re * re + im * im)                               # |x|
        pooled = jnp.sum(mag, axis=-1, keepdims=True) * inv_hw          # (C, 1)
        scale = _se_gate_2d(pooled, w1, w2)                             # (C, 1)
        or_ref[i] = (re * scale).astype(or_ref.dtype)
        oi_ref[i] = (im * scale).astype(oi_ref.dtype)


def _rescale_kernel(scale_ref, x_ref, o_ref):
    # scale_ref: (1, C, 1) f32; x_ref/o_ref: (1, C, THW)
    o_ref[...] = (x_ref[...].astype(jnp.float32) * scale_ref[...]).astype(o_ref.dtype)


# --------------------------- pallas_call wrappers --------------------------- #

def _fused_call_real(x2, w1, w2):
    n, c, hw = x2.shape
    mid = w1.shape[0]
    itemsize = jnp.dtype(x2.dtype).itemsize
    nb = _pick_nb(n, c * hw * itemsize)
    block_bytes = nb * c * hw * itemsize
    kernel = functools.partial(_se_fused_real_kernel, inv_hw=1.0 / hw, nb=nb)
    return pl.pallas_call(
        kernel,
        out_shape=jax.ShapeDtypeStruct((n, c, hw), x2.dtype),
        grid=(n // nb,),
        in_specs=[
            pl.BlockSpec((nb, c, hw), lambda i: (i, 0, 0)),
            pl.BlockSpec((mid, c), lambda i: (0, 0)),
            pl.BlockSpec((c, mid), lambda i: (0, 0)),
        ],
        out_specs=pl.BlockSpec((nb, c, hw), lambda i: (i, 0, 0)),
        compiler_params=pltpu.CompilerParams(
            dimension_semantics=("parallel",),
            vmem_limit_bytes=_vmem_limit_bytes(4 * block_bytes),
        ),
    )(x2, w1, w2)


def _fused_call_complex(xr2, xi2, w1, w2):
    n, c, hw = xr2.shape
    mid = w1.shape[0]
    itemsize = jnp.dtype(xr2.dtype).itemsize
    nb = _pick_nb(n, 2 * c * hw * itemsize)        # real+imag planes per sample
    block_bytes = 2 * nb * c * hw * itemsize
    kernel = functools.partial(_se_fused_complex_kernel, inv_hw=1.0 / hw, nb=nb)
    blk = pl.BlockSpec((nb, c, hw), lambda i: (i, 0, 0))
    return pl.pallas_call(
        kernel,
        out_shape=(jax.ShapeDtypeStruct((n, c, hw), xr2.dtype),
                   jax.ShapeDtypeStruct((n, c, hw), xi2.dtype)),
        grid=(n // nb,),
        in_specs=[blk, blk,
                  pl.BlockSpec((mid, c), lambda i: (0, 0)),
                  pl.BlockSpec((c, mid), lambda i: (0, 0))],
        out_specs=(blk, blk),
        compiler_params=pltpu.CompilerParams(
            dimension_semantics=("parallel",),
            vmem_limit_bytes=_vmem_limit_bytes(4 * block_bytes),
        ),
    )(xr2, xi2, w1, w2)


def _rescale_call(x2, scale, thw):
    n, c, hw = x2.shape
    itemsize = jnp.dtype(x2.dtype).itemsize
    block_bytes = c * thw * itemsize
    scale3 = scale.astype(jnp.float32).reshape(n, c, 1)
    return pl.pallas_call(
        _rescale_kernel,
        out_shape=jax.ShapeDtypeStruct((n, c, hw), x2.dtype),
        grid=(n, pl.cdiv(hw, thw)),
        in_specs=[
            pl.BlockSpec((1, c, 1), lambda i, j: (i, 0, 0)),
            pl.BlockSpec((1, c, thw), lambda i, j: (i, 0, j)),
        ],
        out_specs=pl.BlockSpec((1, c, thw), lambda i, j: (i, 0, j)),
        compiler_params=pltpu.CompilerParams(
            dimension_semantics=("parallel", "parallel"),
            vmem_limit_bytes=_vmem_limit_bytes(4 * block_bytes),
        ),
    )(scale3, x2)


def complex_se(x, w1, w2, *, two_phase=None):
    """Forward pass of ComplexSE.

    x : (N, C, H, W) real or complex.
    w1: (C // reduction, C)   weight of the first bias-free 1x1 conv.
    w2: (C, C // reduction)   weight of the second bias-free 1x1 conv.
    """
    n, c, h, w = x.shape
    hw = h * w
    is_complex = jnp.iscomplexobj(x)
    plane_dtype = x.real.dtype if is_complex else x.dtype
    itemsize = jnp.dtype(plane_dtype).itemsize
    bytes_per_sample = (2 if is_complex else 1) * c * hw * itemsize

    if two_phase is None:
        # Single-pass fused kernel only while one double-buffered sample block
        # fits the cross-generation VMEM budget (tightest on v7x's 64 MiB).
        two_phase = 4 * bytes_per_sample > _VMEM_BLOCK_BUDGET

    if not two_phase:
        if is_complex:
            or2, oi2 = _fused_call_complex(x.real.reshape(n, c, hw),
                                           x.imag.reshape(n, c, hw), w1, w2)
            out2 = lax.complex(or2, oi2)
        else:
            out2 = _fused_call_real(x.reshape(n, c, hw), w1, w2)
    else:
        # Phase 1: pooled |x| mean + SE gate.  Output is only (N, C), so a plain
        # XLA reduce/matmul is cheap and keeps the Pallas pass a pure rescale.
        pooled = jnp.mean(jnp.abs(x), axis=(2, 3)).astype(jnp.float32)     # (N, C)
        hidden = jnp.maximum(pooled @ w1.astype(jnp.float32).T, 0.0)       # (N, C//r)
        scale = jax.nn.sigmoid(hidden @ w2.astype(jnp.float32).T)          # (N, C)
        # Phase 2: rescale-only streaming kernel tiled over (N, HW lane tiles).
        thw = _pick_hw_tile(hw, c, itemsize)
        if is_complex:
            out2 = lax.complex(
                _rescale_call(x.real.reshape(n, c, hw), scale, thw),
                _rescale_call(x.imag.reshape(n, c, hw), scale, thw))
        else:
            out2 = _rescale_call(x.reshape(n, c, hw), scale, thw)

    return out2.reshape(n, c, h, w)


def _reference(x, w1, w2):
    pooled = jnp.mean(jnp.abs(x), axis=(2, 3))            # (N, C)  (real-valued)
    hidden = jnp.maximum(pooled @ w1.T, 0.0)              # (N, C//r)
    scale = jax.nn.sigmoid(hidden @ w2.T)                 # (N, C)
    return x * scale[:, :, None, None]


if __name__ == "__main__":
    N, C, H, W = 2, 64, 16, 16          # channels divisible by reduction=16
    reduction = 16
    mid = C // reduction

    key = jax.random.PRNGKey(0)
    kx, ki, k1, k2, ko = jax.random.split(key, 5)
    x = jax.random.normal(kx, (N, C, H, W), dtype=jnp.float32)
    w1 = jax.random.normal(k1, (mid, C), dtype=jnp.float32) * (1.0 / jnp.sqrt(C))
    w2 = jax.random.normal(k2, (C, mid), dtype=jnp.float32) * (1.0 / jnp.sqrt(mid))

    # 1) fused single-pass kernel, real input (HW = 256 -> lane-dense stores)
    out = jax.block_until_ready(complex_se(x, w1, w2))
    ref = _reference(x, w1, w2)
    assert out.shape == (N, C, H, W) and out.dtype == x.dtype
    assert jnp.allclose(out, ref, atol=1e-5, rtol=1e-5), "real fused mismatch"

    # 2) fused kernel, complex input (the torch.abs(x) magnitude use case)
    xc = x + 1j * jax.random.normal(ki, (N, C, H, W), dtype=jnp.float32)
    out_c = jax.block_until_ready(complex_se(xc, w1, w2))
    ref_c = _reference(xc, w1, w2)
    assert out_c.dtype == xc.dtype
    assert jnp.allclose(out_c, ref_c, atol=1e-5, rtol=1e-5), "complex fused mismatch"

    # 3) spatial size not a multiple of 128 (full-dim lane block)
    x_odd = jax.random.normal(ko, (N, C, 12, 12), dtype=jnp.float32)
    out_odd = jax.block_until_ready(complex_se(x_odd, w1, w2))
    assert jnp.allclose(out_odd, _reference(x_odd, w1, w2), atol=1e-5, rtol=1e-5), \
        "odd-HW fused mismatch"

    # 4) forced two-phase path (large-spatial fallback) for coverage
    out_tp = jax.block_until_ready(complex_se(x, w1, w2, two_phase=True))
    assert jnp.allclose(out_tp, ref, atol=1e-5, rtol=1e-5), "two-phase mismatch"

    # TODO(synk): bf16 streaming (load/store bf16, accumulate pooled sum in f32)
    # would halve HBM traffic and VMEM per block if the surrounding model allows it.
    print("KERNEL_OK")
</pallas_src>

<mosaic_0001>
module attributes {stable_mosaic.version = 11 : i64} {
  func.func @_se_fused_real_kernel(%arg0: i32, %arg1: memref<1x64x256xf32, #tpu.memory_space<vmem>>, %arg2: memref<4x64xf32, #tpu.memory_space<vmem>>, %arg3: memref<64x4xf32, #tpu.memory_space<vmem>>, %arg4: memref<1x64x256xf32, #tpu.memory_space<vmem>>) attributes {dimension_semantics = [#tpu.dimension_semantics<parallel>], iteration_bounds = array<i64: 2>, scalar_prefetch = 0 : i64, scratch_operands = 0 : i64, tpu.core_type = #tpu.core_type<tc>, window_params = [{transform_indices = @transform_0, window_bounds = array<i64: 1, 64, 256>}, {pipeline_mode = #tpu.pipeline_mode<synchronous>, transform_indices = @transform_1, window_bounds = array<i64: 4, 64>}, {pipeline_mode = #tpu.pipeline_mode<synchronous>, transform_indices = @transform_2, window_bounds = array<i64: 64, 4>}, {transform_indices = @transform_3, window_bounds = array<i64: 1, 64, 256>}]} {
    %c0 = arith.constant 0 : index
    %c0_0 = arith.constant 0 : index
    %0 = vector.load %arg2[%c0, %c0_0] : memref<4x64xf32, #tpu.memory_space<vmem>>, vector<4x64xf32>
    %c0_1 = arith.constant 0 : index
    %c0_2 = arith.constant 0 : index
    %1 = vector.load %arg3[%c0_1, %c0_2] : memref<64x4xf32, #tpu.memory_space<vmem>>, vector<64x4xf32>
    %c0_i32 = arith.constant 0 : i32
    %c1_i32 = arith.constant 1 : i32
    %2 = arith.muli %c0_i32, %c1_i32 : i32
    %c0_i32_3 = arith.constant 0 : i32
    %3 = arith.addi %c0_i32_3, %2 : i32
    %4 = arith.index_cast %3 : i32 to index
    %c0_4 = arith.constant 0 : index
    %c0_5 = arith.constant 0 : index
    %5 = vector.load %arg1[%4, %c0_4, %c0_5] : memref<1x64x256xf32, #tpu.memory_space<vmem>>, vector<1x64x256xf32>
    %6 = vector.shape_cast %5 : vector<1x64x256xf32> to vector<64x256xf32>
    %7 = math.absf %6 : vector<64x256xf32>
    %cst = arith.constant dense<0.000000e+00> : vector<64xf32>
    %8 = vector.multi_reduction <add>, %7, %cst [1] : vector<64x256xf32> to vector<64xf32>
    %9 = vector.shape_cast %8 : vector<64xf32> to vector<64x1xf32>
    %cst_6 = arith.constant 3.906250e-03 : f32
    %10 = vector.broadcast %cst_6 : f32 to vector<64x1xf32>
    %11 = arith.mulf %9, %10 : vector<64x1xf32>
    %cst_7 = arith.constant dense<0.000000e+00> : vector<4x1xf32>
    %12 = tpu.matmul %0, %11, %cst_7 {dimension_numbers = #tpu.dot_dimension_numbers<[1], [0], [0], [1], [0, 0, 1, 1], [], []>} : vector<4x64xf32>, vector<64x1xf32>, vector<4x1xf32> -> vector<4x1xf32>
    %cst_8 = arith.constant 0.000000e+00 : f32
    %13 = vector.broadcast %cst_8 : f32 to vector<4x1xf32>
    %14 = arith.maximumf %12, %13 : vector<4x1xf32>
    %cst_9 = arith.constant dense<0.000000e+00> : vector<64x1xf32>
    %15 = tpu.matmul %1, %14, %cst_9 {dimension_numbers = #tpu.dot_dimension_numbers<[1], [0], [0], [1], [0, 0, 1, 1], [], []>} : vector<64x4xf32>, vector<4x1xf32>, vector<64x1xf32> -> vector<64x1xf32>
    %cst_10 = arith.constant 0.000000e+00 : f32
    %16 = vector.broadcast %cst_10 : f32 to vector<64x1xf32>
    %17 = arith.subf %16, %15 : vector<64x1xf32>
    %18 = math.exp %17 : vector<64x1xf32>
    %cst_11 = arith.constant 1.000000e+00 : f32
    %19 = vector.broadcast %cst_11 : f32 to vector<64x1xf32>
    %20 = arith.addf %19, %18 : vector<64x1xf32>
    %cst_12 = arith.constant 1.000000e+00 : f32
    %21 = vector.broadcast %cst_12 : f32 to vector<64x1xf32>
    %22 = arith.divf %21, %20 : vector<64x1xf32>
    %23 = vector.broadcast %22 : vector<64x1xf32> to vector<64x256xf32>
    %24 = arith.mulf %6, %23 : vector<64x256xf32>
    %25 = arith.index_cast %3 : i32 to index
    %c0_13 = arith.constant 0 : index
    %c0_14 = arith.constant 0 : index
    %26 = vector.load %arg4[%25, %c0_13, %c0_14] : memref<1x64x256xf32, #tpu.memory_space<vmem>>, vector<1x64x256xf32>
    %27 = vector.shape_cast %26 : vector<1x64x256xf32> to vector<64x256xf32>
    %28 = vector.shape_cast %24 : vector<64x256xf32> to vector<1x64x256xf32>
    tpu.vector_store %arg4[%25, %c0_13, %c0_14], %28 {strides = array<i32>} : memref<1x64x256xf32, #tpu.memory_space<vmem>>, vector<1x64x256xf32>,
    %c1_i32_15 = arith.constant 1 : i32
    return
  }
  func.func @transform_0(%arg0: i32) -> (i32, i32, i32) {
    %c0_i32 = arith.constant 0 : i32
    %c0_i32_0 = arith.constant 0 : i32
    %c0_i32_1 = arith.constant 0 : i32
    return %arg0, %c0_i32, %c0_i32_0 : i32, i32, i32
  }
  func.func @transform_1(%arg0: i32) -> (i32, i32) {
    %c0_i32 = arith.constant 0 : i32
    %c0_i32_0 = arith.constant 0 : i32
    %c0_i32_1 = arith.constant 0 : i32
    return %c0_i32, %c0_i32_0 : i32, i32
  }
  func.func @transform_2(%arg0: i32) -> (i32, i32) {
    %c0_i32 = arith.constant 0 : i32
    %c0_i32_0 = arith.constant 0 : i32
    %c0_i32_1 = arith.constant 0 : i32
    return %c0_i32, %c0_i32_0 : i32, i32
  }
  func.func @transform_3(%arg0: i32) -> (i32, i32, i32) {
    %c0_i32 = arith.constant 0 : i32
    %c0_i32_0 = arith.constant 0 : i32
    %c0_i32_1 = arith.constant 0 : i32
    return %arg0, %c0_i32, %c0_i32_0 : i32, i32, i32
  }
}

</mosaic_0001>

<llo_original>
// kernel: tpu_custom_call.1
$region0: #{tpu_custom_call.1}
  #allocation0 [shape = 'u32[]', space=smem, size = 0x4, offset = 0x4, fixed_abs, tag = 'smem constant byte address 0x4 - core index']
  #allocation1 [shape = 'u32[72,128]{1,0:T(1,128)}', space=vmem, size = 0x9000, scoped, tag = 'internal scratch']
  %s0 = inlined_call_operand.hbm [shape: f32[2,64,256], index: 0, kind: input, shape index: {}]
  %s1 = inlined_call_operand.vmem [shape: f32[4,64], index: 1, kind: input, shape index: {}]
  %s2 = inlined_call_operand.vmem [shape: f32[64,4], index: 2, kind: input, shape index: {}]
  %s3 = inlined_call_operand.hbm [shape: f32[2,64,256], index: 3, kind: output, shape index: {}]
  %s4 = sld [smem:[#allocation0]]
  $region49: #{tpu_custom_call.1} parent=0
    _
  %s6 = ssub.s32 1, %s4
  %s7 = scalar_select 0, %s6, %s4
  $region1: #{tpu_custom_call.1} parent=0
    #allocation2 [shape = 'u8[131072]{0}', space=vmem, size = 0x20000, scoped, tag = 'input window, operand 0']
    #allocation3 [shape = 's32[2]{0}', space=sflag, size = 0x8, scoped, tag = 'scoped memory for tpu_custom_call.1']
    #allocation4 [shape = 's32[2]{0}', space=sflag, size = 0x8, scoped, tag = 'scoped memory for tpu_custom_call.1']
    #allocation5 [shape = 'u8[131072]{0}', space=vmem, size = 0x20000, scoped, tag = 'output window, operand 0']
    %8 = vsyncpa [#allocation3], 0
    %s9 = scalar_lea.sflag [#allocation3], 1
    %10 = vsyncpa %s9, 0
    %11 = vsyncpa [#allocation4], 0
    %s12 = scalar_lea.sflag [#allocation4], 1
    %13 = vsyncpa %s12, 0
    loop: start=0, step=1, limit=4
    $region2: #{tpu_custom_call.1} parent=1 // loop_pre_header
      _
    $region3: #{tpu_custom_call.1} parent=1 // loop_header
      %s15 = sphi 0, %s19
      %p16 = scmp.ge.s32.totalorder %s15, 4
      %s25 = sphi 0, %s27
      %s28 = sphi 0, %s25
      %s29 = sphi 0, %s28
      %s45 = sphi 0, %s29
      %s49 = sphi 0, %s49
      %s51 = sphi 0, %s49
      %s52 = sphi 0, %s51
      %s66 = sphi 0, %s52
      %s70 = sphi 0, %s70
      %s72 = sphi 0, %s70
      %s73 = sphi 0, %s72
      %s87 = sphi 0, %s73
      %s93 = sphi 0, %s95
      %s96 = sphi 0, %s93
      %s97 = sphi 0, %s96
      %s113 = sphi 0, %s97
    $region4: #{tpu_custom_call.1} parent=1 // loop_header_branch
      %18 = sbr.rel (%p16) target = $region8
    $region5: #{tpu_custom_call.1} parent=1 // loop_body
      %s20 = ssub.s32 %s15, 1
      %s21 = ssub.s32 %s15, 2
      %s22 = sadd.s32 %s15, 1
      %s23 = ssub.s32 %s15, %s22
      %p24 = scmp.eq.s32.totalorder %s23, 0
      %s26 = sadd.s32 %s25, 1
      %s27 = scalar_select %p24, %s25, %s26
      %p30 = pneg %p24
      %p31 = scmp.eq.s32.totalorder %s15, 1
      %p32 = por %p30, %p31
      %p33 = scmp.ne.s32.totalorder %s25, %s28
      %p34 = scmp.eq.s32.totalorder %s15, 0
      %p35 = por %p33, %p34
      %p36 = scmp.ne.s32.totalorder %s25, %s28
      %p37 = scmp.eq.s32.totalorder %s20, 1
      %p38 = por %p36, %p37
      %p39 = scmp.ne.s32.totalorder %s28, %s29
      %p40 = scmp.eq.s32.totalorder %s20, 0
      %p41 = por %p39, %p40
      %p42 = scmp.ne.s32.totalorder %s28, %s29
      %p43 = scmp.eq.s32.totalorder %s21, 1
      %p44 = por %p42, %p43
      %p46 = scmp.ne.s32.totalorder %s29, %s45
      %p47 = scmp.eq.s32.totalorder %s21, 0
      %p48 = por %p46, %p47
      %s50 = sadd.s32 %s49, 1
      %p53 = scmp.eq.s32.totalorder %s15, 1
      %p54 = scmp.ne.s32.totalorder %s49, %s51
      %p55 = scmp.eq.s32.totalorder %s15, 0
      %p56 = por %p54, %p55
      %p57 = scmp.ne.s32.totalorder %s49, %s51
      %p58 = scmp.eq.s32.totalorder %s20, 1
      %p59 = por %p57, %p58
      %p60 = scmp.ne.s32.totalorder %s51, %s52
      %p61 = scmp.eq.s32.totalorder %s20, 0
      %p62 = por %p60, %p61
      %p63 = scmp.ne.s32.totalorder %s51, %s52
      %p64 = scmp.eq.s32.totalorder %s21, 1
      %p65 = por %p63, %p64
      %p67 = scmp.ne.s32.totalorder %s52, %s66
      %p68 = scmp.eq.s32.totalorder %s21, 0
      %p69 = por %p67, %p68
      %s71 = sadd.s32 %s70, 1
      %p74 = scmp.eq.s32.totalorder %s15, 1
      %p75 = scmp.ne.s32.totalorder %s70, %s72
      %p76 = scmp.eq.s32.totalorder %s15, 0
      %p77 = por %p75, %p76
      %p78 = scmp.ne.s32.totalorder %s70, %s72
      %p79 = scmp.eq.s32.totalorder %s20, 1
      %p80 = por %p78, %p79
      %p81 = scmp.ne.s32.totalorder %s72, %s73
      %p82 = scmp.eq.s32.totalorder %s20, 0
      %p83 = por %p81, %p82
      %p84 = scmp.ne.s32.totalorder %s72, %s73
      %p85 = scmp.eq.s32.totalorder %s21, 1
      %p86 = por %p84, %p85
      %p88 = scmp.ne.s32.totalorder %s73, %s87
      %p89 = scmp.eq.s32.totalorder %s21, 0
      %p90 = por %p88, %p89
      %s91 = ssub.s32 %s15, %s22
      %p92 = scmp.eq.s32.totalorder %s91, 0
      %s94 = sadd.s32 %s93, 1
      %s95 = scalar_select %p92, %s93, %s94
      %p98 = pneg %p92
      %p99 = scmp.eq.s32.totalorder %s15, 1
      %p100 = por %p98, %p99
      %p101 = scmp.ne.s32.totalorder %s93, %s96
      %p102 = scmp.eq.s32.totalorder %s15, 0
      %p103 = por %p101, %p102
      %p104 = scmp.ne.s32.totalorder %s93, %s96
      %p105 = scmp.eq.s32.totalorder %s20, 1
      %p106 = por %p104, %p105
      %p107 = scmp.ne.s32.totalorder %s96, %s97
      %p108 = scmp.eq.s32.totalorder %s20, 0
      %p109 = por %p107, %p108
      %p110 = scmp.ne.s32.totalorder %s96, %s97
      %p111 = scmp.eq.s32.totalorder %s21, 1
      %p112 = por %p110, %p111
      %p114 = scmp.ne.s32.totalorder %s97, %s113
      %p115 = scmp.eq.s32.totalorder %s21, 0
      %p116 = por %p114, %p115
      %p117 = scmp.le.s32.totalorder 1, %s15
      %p118 = scmp.lt.s32.totalorder %s15, 3
      %p119 = pnand %p117, %p118
      %p120 = pneg %p119
      // Predicated region
      $region9: #{tpu_custom_call.1} parent=5 // pred_check
        _
      $region10: #{tpu_custom_call.1} parent=5 // pred_check_branch
        %122 = sbr.rel (%p119) target = $region12
      $region11: #{tpu_custom_call.1} parent=5 // pred_region
        %s123 = ssub.s32 %s15, 1
        // Predicated region
        $region13: #{tpu_custom_call.1} parent=11 // pred_check
          %p124 = pneg %p62
        $region14: #{tpu_custom_call.1} parent=11 // pred_check_branch
          %126 = sbr.rel (%p124) target = $region16
        $region15: #{tpu_custom_call.1} parent=11 // pred_region
          _
        $region16: #{tpu_custom_call.1} parent=11 // pred_fallthru
          _
        // Predicated region
        $region17: #{tpu_custom_call.1} parent=11 // pred_check
          %p127 = pneg %p83
        $region18: #{tpu_custom_call.1} parent=11 // pred_check_branch
          %129 = sbr.rel (%p127) target = $region20
        $region19: #{tpu_custom_call.1} parent=11 // pred_region
          _
        $region20: #{tpu_custom_call.1} parent=11 // pred_fallthru
          _
      $region12: #{tpu_custom_call.1} parent=5 // pred_fallthru
        _
      %p130 = scmp.lt.s32.totalorder %s15, 2
      // Predicated region
      $region21: #{tpu_custom_call.1} parent=5 // pred_check
        %p131 = pneg %p130
      $region22: #{tpu_custom_call.1} parent=5 // pred_check_branch
        %133 = sbr.rel (%p131) target = $region24
      $region23: #{tpu_custom_call.1} parent=5 // pred_region
        // Predicated region
        $region25: #{tpu_custom_call.1} parent=23 // pred_check
          %p134 = pneg %p35
        $region26: #{tpu_custom_call.1} parent=23 // pred_check_branch
          %136 = sbr.rel (%p134) target = $region28
        $region27: #{tpu_custom_call.1} parent=23 // pred_region
          %s137 = sand.u32 %s25, 1
          %s138 = scalar_lea.sflag [#allocation3], %s137
          %s139 = sand.u32 %s25, 1
          %s140 = smul.addr %s139, 128
          %s141 = scalar_lea.vmem [#allocation2], %s140
          %143 = vsyncadd %s138, 0
          %s144 = smul.addr %s15, 16
          %s145 = smul.addr %s144, 8
          %s146 = scalar_lea.hbm %s0, %s145
          %s147 = sshll.u32 %s146, 4
          %s148 = int_to_ptr.hbm [resolvable:$true] %s147
          %s149 = sshll.u32 %s141, 4
          %s150 = int_to_ptr.vmem [resolvable:$true] %s149
          %155 = dma.hbm_to_vmem [thread:$0]  %s148, 2048, %s150, %s138, 256, 256, 16
        $region28: #{tpu_custom_call.1} parent=23 // pred_fallthru
          _
      $region24: #{tpu_custom_call.1} parent=5 // pred_fallthru
        _
      %p156 = scmp.le.s32.totalorder 1, %s15
      %p157 = scmp.lt.s32.totalorder %s15, 3
      %p158 = pnand %p156, %p157
      %p159 = pneg %p158
      // Predicated region
      $region29: #{tpu_custom_call.1} parent=5 // pred_check
        _
      $region30: #{tpu_custom_call.1} parent=5 // pred_check_branch
        %161 = sbr.rel (%p158) target = $region32
      $region31: #{tpu_custom_call.1} parent=5 // pred_region
        %s162 = ssub.s32 %s15, 1
        %s163 = sand.u32 %s28, 1
        %s164 = scalar_lea.sflag [#allocation3], %s163
        %s165 = sand.u32 %s28, 1
        %s166 = smul.addr %s165, 128
        %s167 = scalar_lea.vmem [#allocation2], %s166
        // Predicated region
        $region33: #{tpu_custom_call.1} parent=31 // pred_check
          %p168 = pneg %p41
        $region34: #{tpu_custom_call.1} parent=31 // pred_check_branch
          %170 = sbr.rel (%p168) target = $region36
        $region35: #{tpu_custom_call.1} parent=31 // pred_region
          %172 = dma.done %s164, 2048
        $region36: #{tpu_custom_call.1} parent=31 // pred_fallthru
          _
        %s173 = sand.u32 %s28, 1
        %s174 = scalar_lea.sflag [#allocation3], %s173
        %s175 = sand.u32 %s28, 1
        %s176 = smul.addr %s175, 128
        %s177 = scalar_lea.vmem [#allocation2], %s176
        %p178 = pneg %p41
        %p179 = pneg %p38
        %p180 = pneg %p62
        %p181 = pneg %p59
        %p182 = pneg %p83
        %p183 = pneg %p80
        %p184 = pneg %p109
        %p185 = pneg %p106
        %s186 = sand.u32 %s96, 1
        %s187 = scalar_lea.sflag [#allocation4], %s186
        %s188 = sand.u32 %s96, 1
        %s189 = smul.addr %s188, 128
        %s190 = scalar_lea.vmem [#allocation5], %s189
        %v191 = vld [vmem:[%s1] sm:$0xf]
        %v192 = vld [vmem:[%s2] sm:$0xff]
        %v193 = vld [vmem:[%s2 + $0x8] sm:$0xff]
        %v194 = vld [vmem:[%s2 + $0x10] sm:$0xff]
        %v195 = vld [vmem:[%s2 + $0x18] sm:$0xff]
        %v196 = vld [vmem:[%s2 + $0x20] sm:$0xff]
        %v197 = vld [vmem:[%s2 + $0x28] sm:$0xff]
        %v198 = vld [vmem:[%s2 + $0x30] sm:$0xff]
        %v199 = vld [vmem:[%s2 + $0x38] sm:$0xff]
        %v200 = vld [vmem:[%s167] sm:$0xff]
        %v201 = vld [vmem:[%s167 + $0x8] sm:$0xff]
        %v202 = vld [vmem:[%s167 + $0x10] sm:$0xff]
        %v203 = vld [vmem:[%s167 + $0x18] sm:$0xff]
        %v204 = vld [vmem:[%s167 + $0x20] sm:$0xff]
        %v205 = vld [vmem:[%s167 + $0x28] sm:$0xff]
        %v206 = vld [vmem:[%s167 + $0x30] sm:$0xff]
        %v207 = vld [vmem:[%s167 + $0x38] sm:$0xff]
        %v208 = vld [vmem:[%s167 + $0x40] sm:$0xff]
        %v209 = vld [vmem:[%s167 + $0x48] sm:$0xff]
        %v210 = vld [vmem:[%s167 + $0x50] sm:$0xff]
        %v211 = vld [vmem:[%s167 + $0x58] sm:$0xff]
        %v212 = vld [vmem:[%s167 + $0x60] sm:$0xff]
        %v213 = vld [vmem:[%s167 + $0x68] sm:$0xff]
        %v214 = vld [vmem:[%s167 + $0x70] sm:$0xff]
        %v215 = vld [vmem:[%s167 + $0x78] sm:$0xff]
        %v216 = vand.u32 2147483647, %v200
        %v217 = vand.u32 2147483647, %v201
        %v218 = vand.u32 2147483647, %v202
        %v219 = vand.u32 2147483647, %v203
        %v220 = vand.u32 2147483647, %v204
        %v221 = vand.u32 2147483647, %v205
        %v222 = vand.u32 2147483647, %v206
        %v223 = vand.u32 2147483647, %v207
        %v224 = vand.u32 2147483647, %v208
        %v225 = vand.u32 2147483647, %v209
        %v226 = vand.u32 2147483647, %v210
        %v227 = vand.u32 2147483647, %v211
        %v228 = vand.u32 2147483647, %v212
        %v229 = vand.u32 2147483647, %v213
        %v230 = vand.u32 2147483647, %v214
        %v231 = vand.u32 2147483647, %v215
        %v232 = vadd.f32 %v216, %v217
        %233 = vadd.xlane.f32.xlu0 %v232
        %v234 = vpop.xlane.xlu0 %233
        %v235 = vadd.f32 %v218, %v219
        %236 = vadd.xlane.f32.xlu0 %v235
        %v237 = vpop.xlane.xlu0 %236
        %v238 = vadd.f32 %v220, %v221
        %239 = vadd.xlane.f32.xlu0 %v238
        %v240 = vpop.xlane.xlu0 %239
        %v241 = vadd.f32 %v222, %v223
        %242 = vadd.xlane.f32.xlu0 %v241
        %v243 = vpop.xlane.xlu0 %242
        %v244 = vadd.f32 %v224, %v225
        %245 = vadd.xlane.f32.xlu0 %v244
        %v246 = vpop.xlane.xlu0 %245
        %v247 = vadd.f32 %v226, %v227
        %248 = vadd.xlane.f32.xlu0 %v247
        %v249 = vpop.xlane.xlu0 %248
        %v250 = vadd.f32 %v228, %v229
        %251 = vadd.xlane.f32.xlu0 %v250
        %v252 = vpop.xlane.xlu0 %251
        %v253 = vadd.f32 %v230, %v231
        %254 = vadd.xlane.f32.xlu0 %v253
        %v255 = vpop.xlane.xlu0 %254
        %v256 = vmul.f32 %v234, 0.00390625
        %v257 = vmul.f32 %v237, 0.00390625
        %v258 = vmul.f32 %v240, 0.00390625
        %v259 = vmul.f32 %v243, 0.00390625
        %v260 = vmul.f32 %v246, 0.00390625
        %v261 = vmul.f32 %v249, 0.00390625
        %v262 = vmul.f32 %v252, 0.00390625
        %v263 = vmul.f32 %v255, 0.00390625
        %vm264 = vcmask 523264
        %v266 = vsel %vm264, %v191, 0
        %268 = vmatpush.msra.mxu0 0.0
        %269 = vmatpush.msra.mxu0 0.0
        %270 = vmatpush.msra.mxu0 0.0
        %271 = vmatpush.msra.mxu0 0.0
        %272 = vmatpush.msra.mxu0 0.0
        %273 = vmatpush.msra.mxu0 0.0
        %274 = vmatpush.msra.mxu0 0.0
        %275 = vmatpush.msra.mxu0 0.0
        %276 = vmatpush.msra.mxu0 %v263
        %277 = vmatpush.msra.mxu0 %v262
        %278 = vmatpush.msra.mxu0 %v261
        %279 = vmatpush.msra.mxu0 %v260
        %280 = vmatpush.msra.mxu0 %v259
        %281 = vmatpush.msra.mxu0 %v258
        %282 = vmatpush.msra.mxu0 %v257
        %283 = vmatpush.msra.mxu0 %v256
        %284 = vmatmul.f32.gmra.mxu0 %v266
        %v285 = vpop.f32.mrf.mxu0
        %v286 = vadd.f32 0.0, %v285
        %287 = vdwg.mxu0
        %v288 = vmax.f32 %v286, 0.0
        %vm289 = vcmask 31744
        %v291 = vsel %vm289, %v192, 0
        %v294 = vsel %vm289, %v193, 0
        %v297 = vsel %vm289, %v194, 0
        %v300 = vsel %vm289, %v195, 0
        %v303 = vsel %vm289, %v196, 0
        %v306 = vsel %vm289, %v197, 0
        %v309 = vsel %vm289, %v198, 0
        %v312 = vsel %vm289, %v199, 0
        %vm314 = vcmask 1043456
        %v316 = vsel %vm314, %v288, 0
        %318 = vmatpush.msra.mxu0 0.0
        %319 = vmatpush.msra.mxu0 0.0
        %320 = vmatpush.msra.mxu0 0.0
        %321 = vmatpush.msra.mxu0 0.0
        %322 = vmatpush.msra.mxu0 0.0
        %323 = vmatpush.msra.mxu0 0.0
        %324 = vmatpush.msra.mxu0 0.0
        %325 = vmatpush.msra.mxu0 0.0
        %326 = vmatpush.msra.mxu0 0.0
        %327 = vmatpush.msra.mxu0 0.0
        %328 = vmatpush.msra.mxu0 0.0
        %329 = vmatpush.msra.mxu0 0.0
        %330 = vmatpush.msra.mxu0 0.0
        %331 = vmatpush.msra.mxu0 0.0
        %332 = vmatpush.msra.mxu0 0.0
        %333 = vmatpush.msra.mxu0 %v316
        %334 = vmatmul.f32.gmra.mxu0 %v291
        %v335 = vpop.f32.mrf.mxu0
        %v336 = vadd.f32 0.0, %v335
        %337 = vmatmul.f32.gmra.mxu0 %v294
        %v338 = vpop.f32.mrf.mxu0
        %v339 = vadd.f32 0.0, %v338
        %340 = vmatmul.f32.gmra.mxu0 %v297
        %v341 = vpop.f32.mrf.mxu0
        %v342 = vadd.f32 0.0, %v341
        %343 = vmatmul.f32.gmra.mxu0 %v300
        %v344 = vpop.f32.mrf.mxu0
        %v345 = vadd.f32 0.0, %v344
        %346 = vmatmul.f32.gmra.mxu0 %v303
        %v347 = vpop.f32.mrf.mxu0
        %v348 = vadd.f32 0.0, %v347
        %349 = vmatmul.f32.gmra.mxu0 %v306
        %v350 = vpop.f32.mrf.mxu0
        %v351 = vadd.f32 0.0, %v350
        %352 = vmatmul.f32.gmra.mxu0 %v309
        %v353 = vpop.f32.mrf.mxu0
        %v354 = vadd.f32 0.0, %v353
        %355 = vmatmul.f32.gmra.mxu0 %v312
        %v356 = vpop.f32.mrf.mxu0
        %v357 = vadd.f32 0.0, %v356
        %358 = vdwg.mxu0
        %v359 = vsub.f32 0.0, %v336
        %v360 = vsub.f32 0.0, %v339
        %v361 = vsub.f32 0.0, %v342
        %v362 = vsub.f32 0.0, %v345
        %v363 = vsub.f32 0.0, %v348
        %v364 = vsub.f32 0.0, %v351
        %v365 = vsub.f32 0.0, %v354
        %v366 = vsub.f32 0.0, %v357
        %v367 = vmul.f32 %v359, 1.442695
        %v368 = vpow.pop %v367
        %v369 = vmul.f32 %v360, 1.442695
        %v370 = vpow.pop %v369
        %v371 = vmul.f32 %v361, 1.442695
        %v372 = vpow.pop %v371
        %v373 = vmul.f32 %v362, 1.442695
        %v374 = vpow.pop %v373
        %v375 = vmul.f32 %v363, 1.442695
        %v376 = vpow.pop %v375
        %v377 = vmul.f32 %v364, 1.442695
        %v378 = vpow.pop %v377
        %v379 = vmul.f32 %v365, 1.442695
        %v380 = vpow.pop %v379
        %v381 = vmul.f32 %v366, 1.442695
        %v382 = vpow.pop %v381
        %v383 = vadd.f32 %v368, 1.0
        %v384 = vadd.f32 %v370, 1.0
        %v385 = vadd.f32 %v372, 1.0
        %v386 = vadd.f32 %v374, 1.0
        %v387 = vadd.f32 %v376, 1.0
        %v388 = vadd.f32 %v378, 1.0
        %v389 = vadd.f32 %v380, 1.0
        %v390 = vadd.f32 %v382, 1.0
        %v391 = vrcp.pop %v383
        %v392 = vmul.f32 %v383, %v391
        %v393 = vsub.f32 1.0, %v392
        %v394 = vmul.f32 %v391, %v393
        %v395 = vadd.f32 %v391, %v394
        %vm396 = vweird.f32 %v383
        %vm397 = vweird.f32 %v391
        %vm398 = vmor %vm396, %vm397
        %v399 = vsel %vm398, %v391, %v395
        %v400 = vand.u32 2147483647, %v383
        %vm401 = vcmp.eq.f32.partialorder %v400, 8.507059e+37
        %v402 = vand.u32 %v383, 2147483648
        %v403 = vor.u32 1.1754944e-38, %v402
        %v404 = vsel %vm401, %v403, %v399
        %v405 = vmul.f32 1.0, %v404
        %v406 = vrcp.pop %v384
        %v407 = vmul.f32 %v384, %v406
        %v408 = vsub.f32 1.0, %v407
        %v409 = vmul.f32 %v406, %v408
        %v410 = vadd.f32 %v406, %v409
        %vm411 = vweird.f32 %v384
        %vm412 = vweird.f32 %v406
        %vm413 = vmor %vm411, %vm412
        %v414 = vsel %vm413, %v406, %v410
        %v415 = vand.u32 2147483647, %v384
        %vm416 = vcmp.eq.f32.partialorder %v415, 8.507059e+37
        %v417 = vand.u32 %v384, 2147483648
        %v418 = vor.u32 1.1754944e-38, %v417
        %v419 = vsel %vm416, %v418, %v414
        %v420 = vmul.f32 1.0, %v419
        %v421 = vrcp.pop %v385
        %v422 = vmul.f32 %v385, %v421
        %v423 = vsub.f32 1.0, %v422
        %v424 = vmul.f32 %v421, %v423
        %v425 = vadd.f32 %v421, %v424
        %vm426 = vweird.f32 %v385
        %vm427 = vweird.f32 %v421
        %vm428 = vmor %vm426, %vm427
        %v429 = vsel %vm428, %v421, %v425
        %v430 = vand.u32 2147483647, %v385
        %vm431 = vcmp.eq.f32.partialorder %v430, 8.507059e+37
        %v432 = vand.u32 %v385, 2147483648
        %v433 = vor.u32 1.1754944e-38, %v432
        %v434 = vsel %vm431, %v433, %v429
        %v435 = vmul.f32 1.0, %v434
        %v436 = vrcp.pop %v386
        %v437 = vmul.f32 %v386, %v436
        %v438 = vsub.f32 1.0, %v437
        %v439 = vmul.f32 %v436, %v438
        %v440 = vadd.f32 %v436, %v439
        %vm441 = vweird.f32 %v386
        %vm442 = vweird.f32 %v436
        %vm443 = vmor %vm441, %vm442
        %v444 = vsel %vm443, %v436, %v440
        %v445 = vand.u32 2147483647, %v386
        %vm446 = vcmp.eq.f32.partialorder %v445, 8.507059e+37
        %v447 = vand.u32 %v386, 2147483648
        %v448 = vor.u32 1.1754944e-38, %v447
        %v449 = vsel %vm446, %v448, %v444
        %v450 = vmul.f32 1.0, %v449
        %v451 = vrcp.pop %v387
        %v452 = vmul.f32 %v387, %v451
        %v453 = vsub.f32 1.0, %v452
        %v454 = vmul.f32 %v451, %v453
        %v455 = vadd.f32 %v451, %v454
        %vm456 = vweird.f32 %v387
        %vm457 = vweird.f32 %v451
        %vm458 = vmor %vm456, %vm457
        %v459 = vsel %vm458, %v451, %v455
        %v460 = vand.u32 2147483647, %v387
        %vm461 = vcmp.eq.f32.partialorder %v460, 8.507059e+37
        %v462 = vand.u32 %v387, 2147483648
        %v463 = vor.u32 1.1754944e-38, %v462
        %v464 = vsel %vm461, %v463, %v459
        %v465 = vmul.f32 1.0, %v464
        %v466 = vrcp.pop %v388
        %v467 = vmul.f32 %v388, %v466
        %v468 = vsub.f32 1.0, %v467
        %v469 = vmul.f32 %v466, %v468
        %v470 = vadd.f32 %v466, %v469
        %vm471 = vweird.f32 %v388
        %vm472 = vweird.f32 %v466
        %vm473 = vmor %vm471, %vm472
        %v474 = vsel %vm473, %v466, %v470
        %v475 = vand.u32 2147483647, %v388
        %vm476 = vcmp.eq.f32.partialorder %v475, 8.507059e+37
        %v477 = vand.u32 %v388, 2147483648
        %v478 = vor.u32 1.1754944e-38, %v477
        %v479 = vsel %vm476, %v478, %v474
        %v480 = vmul.f32 1.0, %v479
        %v481 = vrcp.pop %v389
        %v482 = vmul.f32 %v389, %v481
        %v483 = vsub.f32 1.0, %v482
        %v484 = vmul.f32 %v481, %v483
        %v485 = vadd.f32 %v481, %v484
        %vm486 = vweird.f32 %v389
        %vm487 = vweird.f32 %v481
        %vm488 = vmor %vm486, %vm487
        %v489 = vsel %vm488, %v481, %v485
        %v490 = vand.u32 2147483647, %v389
        %vm491 = vcmp.eq.f32.partialorder %v490, 8.507059e+37
        %v492 = vand.u32 %v389, 2147483648
        %v493 = vor.u32 1.1754944e-38, %v492
        %v494 = vsel %vm491, %v493, %v489
        %v495 = vmul.f32 1.0, %v494
        %v496 = vrcp.pop %v390
        %v497 = vmul.f32 %v390, %v496
        %v498 = vsub.f32 1.0, %v497
        %v499 = vmul.f32 %v496, %v498
        %v500 = vadd.f32 %v496, %v499
        %vm501 = vweird.f32 %v390
        %vm502 = vweird.f32 %v496
        %vm503 = vmor %vm501, %vm502
        %v504 = vsel %vm503, %v496, %v500
        %v505 = vand.u32 2147483647, %v390
        %vm506 = vcmp.eq.f32.partialorder %v505, 8.507059e+37
        %v507 = vand.u32 %v390, 2147483648
        %v508 = vor.u32 1.1754944e-38, %v507
        %v509 = vsel %vm506, %v508, %v504
        %v510 = vmul.f32 1.0, %v509
        %512 = vset.pattern.permute.xlu0 0
        %513 = vperm.xlu0 %512, %v405
        %v514 = vpop.permute.xlu0 %513
        %517 = vset.pattern.permute.xlu0 0
        %518 = vperm.xlu0 %517, %v420
        %v519 = vpop.permute.xlu0 %518
        %522 = vset.pattern.permute.xlu0 0
        %523 = vperm.xlu0 %522, %v435
        %v524 = vpop.permute.xlu0 %523
        %527 = vset.pattern.permute.xlu0 0
        %528 = vperm.xlu0 %527, %v450
        %v529 = vpop.permute.xlu0 %528
        %532 = vset.pattern.permute.xlu0 0
        %533 = vperm.xlu0 %532, %v465
        %v534 = vpop.permute.xlu0 %533
        %537 = vset.pattern.permute.xlu0 0
        %538 = vperm.xlu0 %537, %v480
        %v539 = vpop.permute.xlu0 %538
        %542 = vset.pattern.permute.xlu0 0
        %543 = vperm.xlu0 %542, %v495
        %v544 = vpop.permute.xlu0 %543
        %547 = vset.pattern.permute.xlu0 0
        %548 = vperm.xlu0 %547, %v510
        %v549 = vpop.permute.xlu0 %548
        %v551 = vmul.f32 %v200, %v514
        %v552 = vmul.f32 %v201, %v514
        %v553 = vmul.f32 %v202, %v519
        %v554 = vmul.f32 %v203, %v519
        %v555 = vmul.f32 %v204, %v524
        %v556 = vmul.f32 %v205, %v524
        %v557 = vmul.f32 %v206, %v529
        %v558 = vmul.f32 %v207, %v529
        %v559 = vmul.f32 %v208, %v534
        %v560 = vmul.f32 %v209, %v534
        %v561 = vmul.f32 %v210, %v539
        %v562 = vmul.f32 %v211, %v539
        %v563 = vmul.f32 %v212, %v544
        %v564 = vmul.f32 %v213, %v544
        %v565 = vmul.f32 %v214, %v549
        %v566 = vmul.f32 %v215, %v549
        %567 = vst [vmem:[%s190] sm:$0xff] %v551
        %568 = vst [vmem:[%s190 + $0x8] sm:$0xff] %v552
        %569 = vst [vmem:[%s190 + $0x10] sm:$0xff] %v553
        %570 = vst [vmem:[%s190 + $0x18] sm:$0xff] %v554
        %571 = vst [vmem:[%s190 + $0x20] sm:$0xff] %v555
        %572 = vst [vmem:[%s190 + $0x28] sm:$0xff] %v556
        %573 = vst [vmem:[%s190 + $0x30] sm:$0xff] %v557
        %574 = vst [vmem:[%s190 + $0x38] sm:$0xff] %v558
        %575 = vst [vmem:[%s190 + $0x40] sm:$0xff] %v559
        %576 = vst [vmem:[%s190 + $0x48] sm:$0xff] %v560
        %577 = vst [vmem:[%s190 + $0x50] sm:$0xff] %v561
        %578 = vst [vmem:[%s190 + $0x58] sm:$0xff] %v562
        %579 = vst [vmem:[%s190 + $0x60] sm:$0xff] %v563
        %580 = vst [vmem:[%s190 + $0x68] sm:$0xff] %v564
        %581 = vst [vmem:[%s190 + $0x70] sm:$0xff] %v565
        %582 = vst [vmem:[%s190 + $0x78] sm:$0xff] %v566
        %s583 = sand.u32 %s96, 1
        %s584 = scalar_lea.sflag [#allocation4], %s583
        %s585 = sand.u32 %s96, 1
        %s586 = smul.addr %s585, 128
        %s587 = scalar_lea.vmem [#allocation5], %s586
        // Predicated region
        $region37: #{tpu_custom_call.1} parent=31 // pred_check
          %p588 = pneg %p106
        $region38: #{tpu_custom_call.1} parent=31 // pred_check_branch
          %590 = sbr.rel (%p588) target = $region40
        $region39: #{tpu_custom_call.1} parent=31 // pred_region
          %592 = vsyncadd %s584, 0
          %s593 = smul.addr %s20, 16
          %s594 = smul.addr %s593, 8
          %s595 = scalar_lea.hbm %s3, %s594
          %s596 = sshll.u32 %s587, 4
          %s597 = int_to_ptr.vmem [resolvable:$true] %s596
          %s598 = sshll.u32 %s595, 4
          %s599 = int_to_ptr.hbm [resolvable:$true] %s598
          %604 = dma.vmem_to_hbm [thread:$0]  %s597, 2048, %s599, %s584, 256, 256, 16
        $region40: #{tpu_custom_call.1} parent=31 // pred_fallthru
          _
      $region32: #{tpu_custom_call.1} parent=5 // pred_fallthru
        _
      %p605 = scmp.le.s32.totalorder 2, %s15
      // Predicated region
      $region41: #{tpu_custom_call.1} parent=5 // pred_check
        %p606 = pneg %p605
      $region42: #{tpu_custom_call.1} parent=5 // pred_check_branch
        %608 = sbr.rel (%p606) target = $region44
      $region43: #{tpu_custom_call.1} parent=5 // pred_region
        %s609 = ssub.s32 %s15, 2
        // Predicated region
        $region45: #{tpu_custom_call.1} parent=43 // pred_check
          %p610 = pneg %p112
        $region46: #{tpu_custom_call.1} parent=43 // pred_check_branch
          %612 = sbr.rel (%p610) target = $region48
        $region47: #{tpu_custom_call.1} parent=43 // pred_region
          %s613 = sand.u32 %s97, 1
          %s614 = scalar_lea.sflag [#allocation4], %s613
          %s615 = sand.u32 %s97, 1
          %s616 = smul.addr %s615, 128
          %s617 = scalar_lea.vmem [#allocation5], %s616
          %619 = dma.done %s614, 2048
        $region48: #{tpu_custom_call.1} parent=43 // pred_fallthru
          _
      $region44: #{tpu_custom_call.1} parent=5 // pred_fallthru
        _
    $region6: #{tpu_custom_call.1} parent=1 // loop_footer
      %s19 = sadd.s32 1, %s15
    $region7: #{tpu_custom_call.1} parent=1 // loop_footer_branch
      %14 = sbr.rel target = $region3
    $region8: #{tpu_custom_call.1} parent=1 // loop_exit
      _
    %620 = vsyncpa [#allocation3], 1
    %s621 = scalar_lea.sflag [#allocation3], 1
    %622 = vsyncpa %s621, 1
    %623 = vsyncpa [#allocation4], 1
    %s624 = scalar_lea.sflag [#allocation4], 1
    %625 = vsyncpa %s624, 1

</llo_original>
